<compile_context>
chip_gen: v5e
topology: v5e:2x2
jax: 0.10.0
libtpu: 0.0.40
codegen_flags: <defaults>
</compile_context>

<pallas_src>
import jax
import jax.numpy as jnp
import numpy as np
from jax.experimental import pallas as pl
from jax.experimental.pallas import tpu as pltpu


# ----------------------------------------------------------------------------
# Math helpers for the pure-JAX reference (f32, unfused)
# ----------------------------------------------------------------------------
def _conv1d_same(x, w, b):
    """'same' 1-D conv.  x: (L, Cin) f32, w: (K, Cin, Cout), b: (1, Cout)."""
    K, Cin, Cout = w.shape
    L = x.shape[0]
    p = K // 2
    zeros = jnp.zeros((p, Cin), jnp.float32)
    xpad = jnp.concatenate([zeros, x, zeros], axis=0)          # (L + 2p, Cin)
    acc = jnp.zeros((L, Cout), jnp.float32)
    for k in range(K):                                         # static unroll
        acc = acc + jnp.dot(xpad[k:k + L, :], w[k],
                            preferred_element_type=jnp.float32)
    return acc + b


def _maxpool3_same(x):
    """MaxPool1d(kernel=3, stride=1, padding=1) with PyTorch's -inf padding."""
    L, C = x.shape
    neg = jnp.full((1, C), -jnp.inf, jnp.float32)
    xpad = jnp.concatenate([neg, x, neg], axis=0)              # (L + 2, C)
    return jnp.maximum(jnp.maximum(xpad[0:L], xpad[1:L + 1]), xpad[2:L + 2])


# ----------------------------------------------------------------------------
# Pallas kernel: one grid step == one batch element, two fused MXU matmuls
# ----------------------------------------------------------------------------
def _inception_kernel(x_ref, wf1_ref, bf1_ref, wf2_ref, bf2_ref, o_ref):
    L = x_ref.shape[1]
    cin = x_ref.shape[2]
    c4 = o_ref.shape[2] // 4

    x = x_ref[0]                                               # (L, Cin) f32
    xb = x.astype(jnp.bfloat16)

    # branch2 front end: MaxPool1d(3, 1, 1); PyTorch pads windows with -inf
    neg = jnp.full((1, cin), -jnp.inf, jnp.float32)
    xm = jnp.concatenate([neg, x, neg], axis=0)                # (L+2, Cin)
    xp = jnp.maximum(jnp.maximum(xm[0:L], xm[1:L + 1]), xm[2:L + 2])

    # stage 1: one fused matmul covering branch1 / branch2 / branch3a / branch4a
    # xcol columns = [x shifted -1 | x | x shifted +1 | maxpool(x)]
    zc = jnp.zeros((1, cin), jnp.bfloat16)
    xz = jnp.concatenate([zc, xb, zc], axis=0)                 # (L+2, Cin) zero pad
    xcol = jnp.concatenate(
        [xz[0:L], xz[1:L + 1], xz[2:L + 2], xp.astype(jnp.bfloat16)],
        axis=-1)                                               # (L, 4*Cin)
    s1 = jnp.dot(xcol, wf1_ref[...],
                 preferred_element_type=jnp.float32) + bf1_ref[...]   # (L, 4*c4)

    # stage 2: one fused matmul for branch3b (conv3) + branch4b (conv5)
    t34 = s1[:, 2 * c4:4 * c4].astype(jnp.bfloat16)            # [t3 | t4] (L, 2*c4)
    z2 = jnp.zeros((2, 2 * c4), jnp.bfloat16)
    tz = jnp.concatenate([z2, t34, z2], axis=0)                # (L+4, 2*c4)
    tcol = jnp.concatenate([tz[j:j + L] for j in range(5)], axis=-1)  # (L, 10*c4)
    s2 = jnp.dot(tcol, wf2_ref[...],
                 preferred_element_type=jnp.float32) + bf2_ref[...]   # (L, 2*c4)

    # ReLU + direct lane-slice stores (no extra concatenated buffer)
    o_ref[0, :, 0:2 * c4] = jnp.maximum(s1[:, 0:2 * c4], 0.0).astype(o_ref.dtype)
    o_ref[0, :, 2 * c4:4 * c4] = jnp.maximum(s2, 0.0).astype(o_ref.dtype)


# ----------------------------------------------------------------------------
# Parameter packing: 12 raw tensors -> 2 fused bf16 weights + 2 fused f32 biases
# ----------------------------------------------------------------------------
def _fuse_params(params):
    (w1, b1, w2, b2, w3a, b3a, w3b, b3b, w4a, b4a, w4b, b4b) = params
    cin, c4 = w1.shape

    # stage-1 weight: rows = [tap-1 | tap0 | tap+1 | maxpool] * Cin
    #                 cols = [y1 | y2 | t3 | t4] * c4
    wf1 = jnp.zeros((4 * cin, 4 * c4), jnp.float32)
    wf1 = wf1.at[cin:2 * cin, 0:c4].set(w1)                    # branch1: 1x1 (center)
    wf1 = wf1.at[3 * cin:4 * cin, c4:2 * c4].set(w2)           # branch2: 1x1 on pool
    wf1 = wf1.at[cin:2 * cin, 2 * c4:3 * c4].set(w3a)          # branch3a: 1x1 (center)
    for k in range(3):                                         # branch4a: conv3
        wf1 = wf1.at[k * cin:(k + 1) * cin, 3 * c4:4 * c4].set(w4a[k])
    bf1 = jnp.concatenate([b1, b2, b3a, b4a], axis=-1)         # (1, 4*c4)

    # stage-2 weight: rows = 5 taps * [t3 | t4], cols = [y3 | y4]
    wf2 = jnp.zeros((10 * c4, 2 * c4), jnp.float32)
    for j in range(5):
        if 1 <= j <= 3:                                        # branch3b: conv3 (taps 1..3)
            wf2 = wf2.at[j * 2 * c4:j * 2 * c4 + c4, 0:c4].set(w3b[j - 1])
        wf2 = wf2.at[j * 2 * c4 + c4:(j + 1) * 2 * c4, c4:2 * c4].set(w4b[j])
    bf2 = jnp.concatenate([b3b, b4b], axis=-1)                 # (1, 2*c4)

    return (wf1.astype(jnp.bfloat16), bf1,
            wf2.astype(jnp.bfloat16), bf2)


# ----------------------------------------------------------------------------
# Wrapper (PyTorch NCW in / NCW out)
# ----------------------------------------------------------------------------
@jax.jit
def inception_layer(x_ncl, params):
    """x_ncl: (N, Cin, L) float32.  Returns (N, out_chan, L) float32."""
    N, Cin, L = x_ncl.shape
    c4 = params[0].shape[1]
    out_chan = 4 * c4

    wf1, bf1, wf2, bf2 = _fuse_params(params)
    x_nlc = jnp.transpose(x_ncl, (0, 2, 1)).astype(jnp.float32)  # (N, L, Cin)

    in_specs = [
        pl.BlockSpec((1, L, Cin), lambda n: (n, 0, 0)),
        pl.BlockSpec(wf1.shape, lambda n: (0, 0)),
        pl.BlockSpec(bf1.shape, lambda n: (0, 0)),
        pl.BlockSpec(wf2.shape, lambda n: (0, 0)),
        pl.BlockSpec(bf2.shape, lambda n: (0, 0)),
    ]

    out_nlc = pl.pallas_call(
        _inception_kernel,
        out_shape=jax.ShapeDtypeStruct((N, L, out_chan), jnp.float32),
        grid=(N,),
        in_specs=in_specs,
        out_specs=pl.BlockSpec((1, L, out_chan), lambda n: (n, 0, 0)),
        compiler_params=pltpu.CompilerParams(
            dimension_semantics=("parallel",),          # batch is independent
            vmem_limit_bytes=32 * 1024 * 1024),
    )(x_nlc, wf1, bf1, wf2, bf2)

    return jnp.transpose(out_nlc, (0, 2, 1))                   # (N, out_chan, L)


# ----------------------------------------------------------------------------
# Deterministic parameter init (synthetic, matches the module's shapes)
# ----------------------------------------------------------------------------
def init_params(key, in_chan, out_chan):
    c4 = out_chan // 4
    ks = jax.random.split(key, 12)

    def w(k, shape, fan_in):
        return (jax.random.uniform(k, shape, jnp.float32, -1.0, 1.0)
                / np.sqrt(fan_in)).astype(jnp.float32)

    # Conv weights stored as (K, Cin, Cout) (1x1 convs as (Cin, Cout));
    # biases stored as (1, Cout).
    w1 = w(ks[0], (in_chan, c4), in_chan);            b1 = w(ks[1], (1, c4), in_chan)
    w2 = w(ks[2], (in_chan, c4), in_chan);            b2 = w(ks[3], (1, c4), in_chan)
    w3a = w(ks[4], (in_chan, c4), in_chan);           b3a = w(ks[5], (1, c4), in_chan)
    w3b = w(ks[6], (3, c4, c4), 3 * c4);              b3b = w(ks[7], (1, c4), 3 * c4)
    w4a = w(ks[8], (3, in_chan, c4), 3 * in_chan);    b4a = w(ks[9], (1, c4), 3 * in_chan)
    w4b = w(ks[10], (5, c4, c4), 5 * c4);             b4b = w(ks[11], (1, c4), 5 * c4)
    return (w1, b1, w2, b2, w3a, b3a, w3b, b3b, w4a, b4a, w4b, b4b)


# ----------------------------------------------------------------------------
# Pure-JAX reference (f32, unfused) for a correctness check
# ----------------------------------------------------------------------------
def reference(x_ncl, params):
    (w1, b1, w2, b2, w3a, b3a, w3b, b3b, w4a, b4a, w4b, b4b) = params

    def one(x):  # x: (L, Cin)
        y1 = x @ w1 + b1
        y2 = _maxpool3_same(x) @ w2 + b2
        y3 = _conv1d_same(x @ w3a + b3a, w3b, b3b)
        y4 = _conv1d_same(_conv1d_same(x, w4a, b4a), w4b, b4b)
        return jnp.maximum(jnp.concatenate([y1, y2, y3, y4], axis=-1), 0.0)

    x_nlc = jnp.transpose(x_ncl, (0, 2, 1)).astype(jnp.float32)
    y_nlc = jax.vmap(one)(x_nlc)
    return jnp.transpose(y_nlc, (0, 2, 1))


if __name__ == "__main__":
    N, in_chan, out_chan, L = 2, 4, 16, 16

    key = jax.random.PRNGKey(0)
    kx, kp = jax.random.split(key)
    x = jax.random.normal(kx, (N, in_chan, L), jnp.float32)
    params = init_params(kp, in_chan, out_chan)

    out = inception_layer(x, params)
    out = jax.block_until_ready(out)

    ref = jax.block_until_ready(reference(x, params))
    # bf16 matmul operands (f32 accumulate) -> loosened tolerance vs. f32 ref.
    np.testing.assert_allclose(np.asarray(out), np.asarray(ref),
                               rtol=5e-2, atol=5e-2)
    assert out.shape == (N, out_chan, L)

    print("KERNEL_OK")
</pallas_src>

<mosaic_0001>
module attributes {stable_mosaic.version = 11 : i64} {
  func.func @_inception_kernel(%arg0: i32, %arg1: memref<1x16x4xf32, #tpu.memory_space<vmem>>, %arg2: memref<16x16xbf16, #tpu.memory_space<vmem>>, %arg3: memref<1x16xf32, #tpu.memory_space<vmem>>, %arg4: memref<40x8xbf16, #tpu.memory_space<vmem>>, %arg5: memref<1x8xf32, #tpu.memory_space<vmem>>, %arg6: memref<1x16x16xf32, #tpu.memory_space<vmem>>) attributes {dimension_semantics = [#tpu.dimension_semantics<parallel>], iteration_bounds = array<i64: 2>, scalar_prefetch = 0 : i64, scratch_operands = 0 : i64, tpu.core_type = #tpu.core_type<tc>, window_params = [{transform_indices = @transform_0, window_bounds = array<i64: 1, 16, 4>}, {pipeline_mode = #tpu.pipeline_mode<synchronous>, transform_indices = @transform_1, window_bounds = array<i64: 16, 16>}, {pipeline_mode = #tpu.pipeline_mode<synchronous>, transform_indices = @transform_2, window_bounds = array<i64: 1, 16>}, {pipeline_mode = #tpu.pipeline_mode<synchronous>, transform_indices = @transform_3, window_bounds = array<i64: 40, 8>}, {pipeline_mode = #tpu.pipeline_mode<synchronous>, transform_indices = @transform_4, window_bounds = array<i64: 1, 8>}, {transform_indices = @transform_5, window_bounds = array<i64: 1, 16, 16>}]} {
    %c0 = arith.constant 0 : index
    %c0_0 = arith.constant 0 : index
    %c0_1 = arith.constant 0 : index
    %0 = vector.load %arg1[%c0, %c0_0, %c0_1] : memref<1x16x4xf32, #tpu.memory_space<vmem>>, vector<1x16x4xf32>
    %1 = vector.shape_cast %0 : vector<1x16x4xf32> to vector<16x4xf32>
    %2 = arith.truncf %1 : vector<16x4xf32> to vector<16x4xbf16>
    %cst = arith.constant 0xFF800000 : f32
    %3 = vector.broadcast %cst : f32 to vector<1x4xf32>
    %4 = tpu.concatenate %3, %1, %3 in 0 : vector<1x4xf32>, vector<16x4xf32>, vector<1x4xf32> -> vector<18x4xf32>
    %5 = vector.extract_strided_slice %4 {offsets = [0, 0], sizes = [16, 4], strides = [1, 1]} : vector<18x4xf32> to vector<16x4xf32>
    %6 = vector.extract_strided_slice %4 {offsets = [1, 0], sizes = [16, 4], strides = [1, 1]} : vector<18x4xf32> to vector<16x4xf32>
    %7 = arith.maximumf %5, %6 : vector<16x4xf32>
    %8 = vector.extract_strided_slice %4 {offsets = [2, 0], sizes = [16, 4], strides = [1, 1]} : vector<18x4xf32> to vector<16x4xf32>
    %9 = arith.maximumf %7, %8 : vector<16x4xf32>
    %cst_2 = arith.constant 0.000000e+00 : bf16
    %10 = vector.broadcast %cst_2 : bf16 to vector<1x4xbf16>
    %11 = tpu.concatenate %10, %2, %10 in 0 : vector<1x4xbf16>, vector<16x4xbf16>, vector<1x4xbf16> -> vector<18x4xbf16>
    %12 = vector.extract_strided_slice %11 {offsets = [0, 0], sizes = [16, 4], strides = [1, 1]} : vector<18x4xbf16> to vector<16x4xbf16>
    %13 = vector.extract_strided_slice %11 {offsets = [1, 0], sizes = [16, 4], strides = [1, 1]} : vector<18x4xbf16> to vector<16x4xbf16>
    %14 = vector.extract_strided_slice %11 {offsets = [2, 0], sizes = [16, 4], strides = [1, 1]} : vector<18x4xbf16> to vector<16x4xbf16>
    %15 = arith.truncf %9 : vector<16x4xf32> to vector<16x4xbf16>
    %16 = tpu.concatenate %12, %13, %14, %15 in 1 : vector<16x4xbf16>, vector<16x4xbf16>, vector<16x4xbf16>, vector<16x4xbf16> -> vector<16x16xbf16>
    %c0_3 = arith.constant 0 : index
    %c0_4 = arith.constant 0 : index
    %17 = vector.load %arg2[%c0_3, %c0_4] : memref<16x16xbf16, #tpu.memory_space<vmem>>, vector<16x16xbf16>
    %cst_5 = arith.constant dense<0.000000e+00> : vector<16x16xf32>
    %18 = tpu.matmul %16, %17, %cst_5 {dimension_numbers = #tpu.dot_dimension_numbers<[1], [0], [0], [1], [0, 0, 1, 1], [], []>} : vector<16x16xbf16>, vector<16x16xbf16>, vector<16x16xf32> -> vector<16x16xf32>
    %c0_6 = arith.constant 0 : index
    %c0_7 = arith.constant 0 : index
    %19 = vector.load %arg3[%c0_6, %c0_7] : memref<1x16xf32, #tpu.memory_space<vmem>>, vector<1x16xf32>
    %20 = vector.broadcast %19 : vector<1x16xf32> to vector<16x16xf32>
    %21 = arith.addf %18, %20 : vector<16x16xf32>
    %22 = vector.extract_strided_slice %21 {offsets = [0, 8], sizes = [16, 8], strides = [1, 1]} : vector<16x16xf32> to vector<16x8xf32>
    %23 = arith.truncf %22 : vector<16x8xf32> to vector<16x8xbf16>
    %cst_8 = arith.constant 0.000000e+00 : bf16
    %24 = vector.broadcast %cst_8 : bf16 to vector<2x8xbf16>
    %25 = tpu.concatenate %24, %23, %24 in 0 : vector<2x8xbf16>, vector<16x8xbf16>, vector<2x8xbf16> -> vector<20x8xbf16>
    %26 = vector.extract_strided_slice %25 {offsets = [0, 0], sizes = [16, 8], strides = [1, 1]} : vector<20x8xbf16> to vector<16x8xbf16>
    %27 = vector.extract_strided_slice %25 {offsets = [1, 0], sizes = [16, 8], strides = [1, 1]} : vector<20x8xbf16> to vector<16x8xbf16>
    %28 = vector.extract_strided_slice %25 {offsets = [2, 0], sizes = [16, 8], strides = [1, 1]} : vector<20x8xbf16> to vector<16x8xbf16>
    %29 = vector.extract_strided_slice %25 {offsets = [3, 0], sizes = [16, 8], strides = [1, 1]} : vector<20x8xbf16> to vector<16x8xbf16>
    %30 = vector.extract_strided_slice %25 {offsets = [4, 0], sizes = [16, 8], strides = [1, 1]} : vector<20x8xbf16> to vector<16x8xbf16>
    %31 = tpu.concatenate %26, %27, %28, %29, %30 in 1 : vector<16x8xbf16>, vector<16x8xbf16>, vector<16x8xbf16>, vector<16x8xbf16>, vector<16x8xbf16> -> vector<16x40xbf16>
    %c0_9 = arith.constant 0 : index
    %c0_10 = arith.constant 0 : index
    %32 = vector.load %arg4[%c0_9, %c0_10] : memref<40x8xbf16, #tpu.memory_space<vmem>>, vector<40x8xbf16>
    %cst_11 = arith.constant dense<0.000000e+00> : vector<16x8xf32>
    %33 = tpu.matmul %31, %32, %cst_11 {dimension_numbers = #tpu.dot_dimension_numbers<[1], [0], [0], [1], [0, 0, 1, 1], [], []>} : vector<16x40xbf16>, vector<40x8xbf16>, vector<16x8xf32> -> vector<16x8xf32>
    %c0_12 = arith.constant 0 : index
    %c0_13 = arith.constant 0 : index
    %34 = vector.load %arg5[%c0_12, %c0_13] : memref<1x8xf32, #tpu.memory_space<vmem>>, vector<1x8xf32>
    %35 = vector.broadcast %34 : vector<1x8xf32> to vector<16x8xf32>
    %36 = arith.addf %33, %35 : vector<16x8xf32>
    %37 = vector.extract_strided_slice %21 {offsets = [0, 0], sizes = [16, 8], strides = [1, 1]} : vector<16x16xf32> to vector<16x8xf32>
    %cst_14 = arith.constant 0.000000e+00 : f32
    %38 = vector.broadcast %cst_14 : f32 to vector<16x8xf32>
    %39 = arith.maximumf %37, %38 : vector<16x8xf32>
    %c0_15 = arith.constant 0 : index
    %c0_16 = arith.constant 0 : index
    %c0_17 = arith.constant 0 : index
    %40 = vector.load %arg6[%c0_15, %c0_16, %c0_17] : memref<1x16x16xf32, #tpu.memory_space<vmem>>, vector<1x16x8xf32>
    %41 = vector.shape_cast %40 : vector<1x16x8xf32> to vector<16x8xf32>
    %42 = vector.shape_cast %39 : vector<16x8xf32> to vector<1x16x8xf32>
    tpu.vector_store %arg6[%c0_15, %c0_16, %c0_17], %42 {strides = array<i32>} : memref<1x16x16xf32, #tpu.memory_space<vmem>>, vector<1x16x8xf32>,
    %cst_18 = arith.constant 0.000000e+00 : f32
    %43 = vector.broadcast %cst_18 : f32 to vector<16x8xf32>
    %44 = arith.maximumf %36, %43 : vector<16x8xf32>
    %c0_19 = arith.constant 0 : index
    %c0_20 = arith.constant 0 : index
    %c8 = arith.constant 8 : index
    %45 = vector.load %arg6[%c0_19, %c0_20, %c8] : memref<1x16x16xf32, #tpu.memory_space<vmem>>, vector<1x16x8xf32>
    %46 = vector.shape_cast %45 : vector<1x16x8xf32> to vector<16x8xf32>
    %47 = vector.shape_cast %44 : vector<16x8xf32> to vector<1x16x8xf32>
    tpu.vector_store %arg6[%c0_19, %c0_20, %c8], %47 {strides = array<i32>} : memref<1x16x16xf32, #tpu.memory_space<vmem>>, vector<1x16x8xf32>,
    return
  }
  func.func @transform_0(%arg0: i32) -> (i32, i32, i32) {
    %c0_i32 = arith.constant 0 : i32
    %c0_i32_0 = arith.constant 0 : i32
    %c0_i32_1 = arith.constant 0 : i32
    return %arg0, %c0_i32, %c0_i32_0 : i32, i32, i32
  }
  func.func @transform_1(%arg0: i32) -> (i32, i32) {
    %c0_i32 = arith.constant 0 : i32
    %c0_i32_0 = arith.constant 0 : i32
    %c0_i32_1 = arith.constant 0 : i32
    return %c0_i32, %c0_i32_0 : i32, i32
  }
  func.func @transform_2(%arg0: i32) -> (i32, i32) {
    %c0_i32 = arith.constant 0 : i32
    %c0_i32_0 = arith.constant 0 : i32
    %c0_i32_1 = arith.constant 0 : i32
    return %c0_i32, %c0_i32_0 : i32, i32
  }
  func.func @transform_3(%arg0: i32) -> (i32, i32) {
    %c0_i32 = arith.constant 0 : i32
    %c0_i32_0 = arith.constant 0 : i32
    %c0_i32_1 = arith.constant 0 : i32
    return %c0_i32, %c0_i32_0 : i32, i32
  }
  func.func @transform_4(%arg0: i32) -> (i32, i32) {
    %c0_i32 = arith.constant 0 : i32
    %c0_i32_0 = arith.constant 0 : i32
    %c0_i32_1 = arith.constant 0 : i32
    return %c0_i32, %c0_i32_0 : i32, i32
  }
  func.func @transform_5(%arg0: i32) -> (i32, i32, i32) {
    %c0_i32 = arith.constant 0 : i32
    %c0_i32_0 = arith.constant 0 : i32
    %c0_i32_1 = arith.constant 0 : i32
    return %arg0, %c0_i32, %c0_i32_0 : i32, i32, i32
  }
}

</mosaic_0001>

<llo_original>
// kernel: inception_layer.1
$region0: #{inception_layer.1}
  #allocation0 [shape = 'u32[]', space=smem, size = 0x4, offset = 0x4, fixed_abs, tag = 'smem constant byte address 0x4 - core index']
  #allocation1 [shape = 'u32[72,128]{1,0:T(1,128)}', space=vmem, size = 0x9000, scoped, tag = 'internal scratch']
  %s0 = inlined_call_operand.vmem [shape: f32[2,16,4], index: 0, kind: input, shape index: {}]
  %s1 = inlined_call_operand.vmem [shape: bf16[16,16], index: 1, kind: input, shape index: {}]
  %s2 = inlined_call_operand.vmem [shape: f32[1,16], index: 2, kind: input, shape index: {}]
  %s3 = inlined_call_operand.vmem [shape: bf16[40,8], index: 3, kind: input, shape index: {}]
  %s4 = inlined_call_operand.vmem [shape: f32[1,8], index: 4, kind: input, shape index: {}]
  %s5 = inlined_call_operand.vmem [shape: f32[2,16,16], index: 5, kind: output, shape index: {}]
  %s6 = sld [smem:[#allocation0]]
  $region53: #{inception_layer.1} parent=0
    _
  %s8 = ssub.s32 1, %s6
  %s9 = scalar_select 0, %s8, %s6
  loop: start=0, step=1, limit=4
  $region2: #{inception_layer.1} parent=0 // loop_pre_header
    _
  $region3: #{inception_layer.1} parent=0 // loop_header
    %s11 = sphi 0, %s15
    %p12 = scmp.ge.s32.totalorder %s11, 4
    %s21 = sphi 0, %s23
    %s24 = sphi 0, %s21
    %s25 = sphi 0, %s24
    %s41 = sphi 0, %s25
    %s45 = sphi 0, %s45
    %s47 = sphi 0, %s45
    %s48 = sphi 0, %s47
    %s62 = sphi 0, %s48
    %s66 = sphi 0, %s66
    %s68 = sphi 0, %s66
    %s69 = sphi 0, %s68
    %s83 = sphi 0, %s69
    %s87 = sphi 0, %s87
    %s89 = sphi 0, %s87
    %s90 = sphi 0, %s89
    %s104 = sphi 0, %s90
    %s108 = sphi 0, %s108
    %s110 = sphi 0, %s108
    %s111 = sphi 0, %s110
    %s125 = sphi 0, %s111
    %s131 = sphi 0, %s133
    %s134 = sphi 0, %s131
    %s135 = sphi 0, %s134
    %s151 = sphi 0, %s135
  $region4: #{inception_layer.1} parent=0 // loop_header_branch
    %14 = sbr.rel (%p12) target = $region8
  $region5: #{inception_layer.1} parent=0 // loop_body
    %s16 = ssub.s32 %s11, 1
    %s17 = ssub.s32 %s11, 2
    %s18 = sadd.s32 %s11, 1
    %s19 = ssub.s32 %s11, %s18
    %p20 = scmp.eq.s32.totalorder %s19, 0
    %s22 = sadd.s32 %s21, 1
    %s23 = scalar_select %p20, %s21, %s22
    %p26 = pneg %p20
    %p27 = scmp.eq.s32.totalorder %s11, 1
    %p28 = por %p26, %p27
    %p29 = scmp.ne.s32.totalorder %s21, %s24
    %p30 = scmp.eq.s32.totalorder %s11, 0
    %p31 = por %p29, %p30
    %p32 = scmp.ne.s32.totalorder %s21, %s24
    %p33 = scmp.eq.s32.totalorder %s16, 1
    %p34 = por %p32, %p33
    %p35 = scmp.ne.s32.totalorder %s24, %s25
    %p36 = scmp.eq.s32.totalorder %s16, 0
    %p37 = por %p35, %p36
    %p38 = scmp.ne.s32.totalorder %s24, %s25
    %p39 = scmp.eq.s32.totalorder %s17, 1
    %p40 = por %p38, %p39
    %p42 = scmp.ne.s32.totalorder %s25, %s41
    %p43 = scmp.eq.s32.totalorder %s17, 0
    %p44 = por %p42, %p43
    %s46 = sadd.s32 %s45, 1
    %p49 = scmp.eq.s32.totalorder %s11, 1
    %p50 = scmp.ne.s32.totalorder %s45, %s47
    %p51 = scmp.eq.s32.totalorder %s11, 0
    %p52 = por %p50, %p51
    %p53 = scmp.ne.s32.totalorder %s45, %s47
    %p54 = scmp.eq.s32.totalorder %s16, 1
    %p55 = por %p53, %p54
    %p56 = scmp.ne.s32.totalorder %s47, %s48
    %p57 = scmp.eq.s32.totalorder %s16, 0
    %p58 = por %p56, %p57
    %p59 = scmp.ne.s32.totalorder %s47, %s48
    %p60 = scmp.eq.s32.totalorder %s17, 1
    %p61 = por %p59, %p60
    %p63 = scmp.ne.s32.totalorder %s48, %s62
    %p64 = scmp.eq.s32.totalorder %s17, 0
    %p65 = por %p63, %p64
    %s67 = sadd.s32 %s66, 1
    %p70 = scmp.eq.s32.totalorder %s11, 1
    %p71 = scmp.ne.s32.totalorder %s66, %s68
    %p72 = scmp.eq.s32.totalorder %s11, 0
    %p73 = por %p71, %p72
    %p74 = scmp.ne.s32.totalorder %s66, %s68
    %p75 = scmp.eq.s32.totalorder %s16, 1
    %p76 = por %p74, %p75
    %p77 = scmp.ne.s32.totalorder %s68, %s69
    %p78 = scmp.eq.s32.totalorder %s16, 0
    %p79 = por %p77, %p78
    %p80 = scmp.ne.s32.totalorder %s68, %s69
    %p81 = scmp.eq.s32.totalorder %s17, 1
    %p82 = por %p80, %p81
    %p84 = scmp.ne.s32.totalorder %s69, %s83
    %p85 = scmp.eq.s32.totalorder %s17, 0
    %p86 = por %p84, %p85
    %s88 = sadd.s32 %s87, 1
    %p91 = scmp.eq.s32.totalorder %s11, 1
    %p92 = scmp.ne.s32.totalorder %s87, %s89
    %p93 = scmp.eq.s32.totalorder %s11, 0
    %p94 = por %p92, %p93
    %p95 = scmp.ne.s32.totalorder %s87, %s89
    %p96 = scmp.eq.s32.totalorder %s16, 1
    %p97 = por %p95, %p96
    %p98 = scmp.ne.s32.totalorder %s89, %s90
    %p99 = scmp.eq.s32.totalorder %s16, 0
    %p100 = por %p98, %p99
    %p101 = scmp.ne.s32.totalorder %s89, %s90
    %p102 = scmp.eq.s32.totalorder %s17, 1
    %p103 = por %p101, %p102
    %p105 = scmp.ne.s32.totalorder %s90, %s104
    %p106 = scmp.eq.s32.totalorder %s17, 0
    %p107 = por %p105, %p106
    %s109 = sadd.s32 %s108, 1
    %p112 = scmp.eq.s32.totalorder %s11, 1
    %p113 = scmp.ne.s32.totalorder %s108, %s110
    %p114 = scmp.eq.s32.totalorder %s11, 0
    %p115 = por %p113, %p114
    %p116 = scmp.ne.s32.totalorder %s108, %s110
    %p117 = scmp.eq.s32.totalorder %s16, 1
    %p118 = por %p116, %p117
    %p119 = scmp.ne.s32.totalorder %s110, %s111
    %p120 = scmp.eq.s32.totalorder %s16, 0
    %p121 = por %p119, %p120
    %p122 = scmp.ne.s32.totalorder %s110, %s111
    %p123 = scmp.eq.s32.totalorder %s17, 1
    %p124 = por %p122, %p123
    %p126 = scmp.ne.s32.totalorder %s111, %s125
    %p127 = scmp.eq.s32.totalorder %s17, 0
    %p128 = por %p126, %p127
    %s129 = ssub.s32 %s11, %s18
    %p130 = scmp.eq.s32.totalorder %s129, 0
    %s132 = sadd.s32 %s131, 1
    %s133 = scalar_select %p130, %s131, %s132
    %p136 = pneg %p130
    %p137 = scmp.eq.s32.totalorder %s11, 1
    %p138 = por %p136, %p137
    %p139 = scmp.ne.s32.totalorder %s131, %s134
    %p140 = scmp.eq.s32.totalorder %s11, 0
    %p141 = por %p139, %p140
    %p142 = scmp.ne.s32.totalorder %s131, %s134
    %p143 = scmp.eq.s32.totalorder %s16, 1
    %p144 = por %p142, %p143
    %p145 = scmp.ne.s32.totalorder %s134, %s135
    %p146 = scmp.eq.s32.totalorder %s16, 0
    %p147 = por %p145, %p146
    %p148 = scmp.ne.s32.totalorder %s134, %s135
    %p149 = scmp.eq.s32.totalorder %s17, 1
    %p150 = por %p148, %p149
    %p152 = scmp.ne.s32.totalorder %s135, %s151
    %p153 = scmp.eq.s32.totalorder %s17, 0
    %p154 = por %p152, %p153
    %p155 = scmp.le.s32.totalorder 1, %s11
    %p156 = scmp.lt.s32.totalorder %s11, 3
    %p157 = pnand %p155, %p156
    %p158 = pneg %p157
    // Predicated region
    $region9: #{inception_layer.1} parent=5 // pred_check
      _
    $region10: #{inception_layer.1} parent=5 // pred_check_branch
      %160 = sbr.rel (%p157) target = $region12
    $region11: #{inception_layer.1} parent=5 // pred_region
      %s161 = ssub.s32 %s11, 1
      // Predicated region
      $region13: #{inception_layer.1} parent=11 // pred_check
        %p162 = pneg %p58
      $region14: #{inception_layer.1} parent=11 // pred_check_branch
        %164 = sbr.rel (%p162) target = $region16
      $region15: #{inception_layer.1} parent=11 // pred_region
        _
      $region16: #{inception_layer.1} parent=11 // pred_fallthru
        _
      // Predicated region
      $region17: #{inception_layer.1} parent=11 // pred_check
        %p165 = pneg %p79
      $region18: #{inception_layer.1} parent=11 // pred_check_branch
        %167 = sbr.rel (%p165) target = $region20
      $region19: #{inception_layer.1} parent=11 // pred_region
        _
      $region20: #{inception_layer.1} parent=11 // pred_fallthru
        _
      // Predicated region
      $region21: #{inception_layer.1} parent=11 // pred_check
        %p168 = pneg %p100
      $region22: #{inception_layer.1} parent=11 // pred_check_branch
        %170 = sbr.rel (%p168) target = $region24
      $region23: #{inception_layer.1} parent=11 // pred_region
        _
      $region24: #{inception_layer.1} parent=11 // pred_fallthru
        _
      // Predicated region
      $region25: #{inception_layer.1} parent=11 // pred_check
        %p171 = pneg %p121
      $region26: #{inception_layer.1} parent=11 // pred_check_branch
        %173 = sbr.rel (%p171) target = $region28
      $region27: #{inception_layer.1} parent=11 // pred_region
        _
      $region28: #{inception_layer.1} parent=11 // pred_fallthru
        _
    $region12: #{inception_layer.1} parent=5 // pred_fallthru
      _
    %p174 = scmp.lt.s32.totalorder %s11, 2
    // Predicated region
    $region29: #{inception_layer.1} parent=5 // pred_check
      %p175 = pneg %p174
    $region30: #{inception_layer.1} parent=5 // pred_check_branch
      %177 = sbr.rel (%p175) target = $region32
    $region31: #{inception_layer.1} parent=5 // pred_region
      // Predicated region
      $region33: #{inception_layer.1} parent=31 // pred_check
        %p178 = pneg %p31
      $region34: #{inception_layer.1} parent=31 // pred_check_branch
        %180 = sbr.rel (%p178) target = $region36
      $region35: #{inception_layer.1} parent=31 // pred_region
        %p181 = scmp.lt.s32.totalorder %s11, 1
        %s182 = scalar_select %p181, %s11, 1
        %s183 = smul.addr %s182, 2
        %s184 = smul.addr %s183, 8
        %s185 = scalar_lea.vmem %s0, %s184
      $region36: #{inception_layer.1} parent=31 // pred_fallthru
        _
    $region32: #{inception_layer.1} parent=5 // pred_fallthru
      _
    %p186 = scmp.le.s32.totalorder 1, %s11
    %p187 = scmp.lt.s32.totalorder %s11, 3
    %p188 = pnand %p186, %p187
    %p189 = pneg %p188
    // Predicated region
    $region37: #{inception_layer.1} parent=5 // pred_check
      _
    $region38: #{inception_layer.1} parent=5 // pred_check_branch
      %191 = sbr.rel (%p188) target = $region40
    $region39: #{inception_layer.1} parent=5 // pred_region
      %s192 = ssub.s32 %s11, 1
      %p193 = scmp.lt.s32.totalorder %s16, 1
      %s194 = scalar_select %p193, %s16, 1
      %s195 = smul.addr %s194, 2
      %s196 = smul.addr %s195, 8
      %s197 = scalar_lea.vmem %s0, %s196
      %p198 = pneg %p37
      %p199 = pneg %p34
      %p200 = pneg %p58
      %p201 = pneg %p55
      %p202 = pneg %p79
      %p203 = pneg %p76
      %p204 = pneg %p100
      %p205 = pneg %p97
      %p206 = pneg %p121
      %p207 = pneg %p118
      %p208 = pneg %p147
      %p209 = pneg %p144
      %p210 = scmp.lt.s32.totalorder %s16, 1
      %s211 = scalar_select %p210, %s16, 1
      %s212 = smul.addr %s211, 2
      %s213 = smul.addr %s212, 8
      %s214 = scalar_lea.vmem %s5, %s213
      %p215 = scmp.lt.s32.totalorder %s16, 1
      %s216 = scalar_select %p215, %s16, 1
      %s217 = smul.addr %s216, 2
      %s218 = smul.addr %s217, 8
      %s219 = scalar_lea.vmem %s0, %s218
      %p220 = scmp.lt.s32.totalorder %s16, 1
      %s221 = scalar_select %p220, %s16, 1
      %s222 = smul.addr %s221, 2
      %s223 = smul.addr %s222, 8
      %s224 = scalar_lea.vmem %s5, %s223
      %v226 = vld [vmem:[%s219] sm:$0xff]
      %v227 = vld [vmem:[%s219 + $0x8] sm:$0xff]
      %v228 = vpack.c.bf16 %v226, %v226
      %v229 = vpack.c.bf16 %v227, %v227
      %vm232 = vcmask 1040384
      %v233 = vrot.slane %v226, 7
      %v234 = vrot.slane %v227, 7
      %v235 = vsel %vm232, %v233, %v234
      %v239 = vsel %vm232, -inf, %v233
      %v240 = vsel %vm232, %v234, -inf
      %vm243 = vcmask 1046528
      %v244 = vrot.slane %v239, 1
      %v245 = vrot.slane %v235, 1
      %v246 = vsel %vm243, %v244, %v245
      %v247 = vrot.slane %v240, 1
      %v248 = vsel %vm243, %v245, %v247
      %v251 = vmax.f32 %v239, %v246
      %v252 = vmax.f32 %v235, %v248
      %vm253 = vcmask 1045504
      %v254 = vrot.slane %v239, 2
      %v255 = vrot.slane %v235, 2
      %v256 = vsel %vm253, %v254, %v255
      %v257 = vrot.slane %v240, 2
      %v258 = vsel %vm253, %v255, %v257
      %v261 = vmax.f32 %v251, %v256
      %v262 = vmax.f32 %v252, %v258
      %v265 = vunpack.c.l.b16 %v228
      %v266 = vunpack.c.l.b16 %v229
      %v267 = vpack.c.b16 %v266, %v265
      %v269 = vshrl.u32 %v267, 16
      %v271 = vrot.slane %v269, 7
      %v272 = vshll.u32 %v267, 16
      %v274 = vor.u32 %v271, %v272
      %vm277 = vcmask 1040384
      %vm278 = vsmask.f32 256
      %vm279 = vmand %vm277, %vm278
      %v280 = vsel %vm279, 0, %v274
      %v281 = vsel %vm279, %v271, 0
      %v282 = vpack.c.bf16 %v261, %v261
      %v283 = vpack.c.bf16 %v262, %v262
      %vm284 = vsmask.f32 7424
      %v286 = vshrl.u32 %v280, 16
      %v288 = vshll.u32 %v280, 16
      %v290 = vrot.slane %v288, 1
      %v291 = vor.u32 %v286, %v290
      %v293 = vshll.u32 %v281, 16
      %v295 = vrot.slane %v293, 1
      %v296 = vsel %vm284, %v291, %v295
      %297 = vrot.lane.b32.xlu0 %v296, 4
      %v298 = vpop.permute.xlu0 %297
      %vm301 = vcmask 1046528
      %v302 = vrot.slane %v280, 1
      %v303 = vrot.slane %v281, 1
      %v304 = vsel %vm301, %v302, %v303
      %305 = vrot.lane.b32.xlu0 %v304, 8
      %v306 = vpop.permute.xlu0 %305
      %v309 = vunpack.c.l.b16 %v282
      %v310 = vunpack.c.l.b16 %v283
      %v311 = vpack.c.b16 %v310, %v309
      %312 = vrot.lane.b32.xlu0 %v311, 12
      %v313 = vpop.permute.xlu0 %312
      %vm314 = vcmask 31744
      %v316 = vsel %vm314, %v280, %v298
      %vm317 = vcmask 64512
      %v319 = vsel %vm317, %v316, %v306
      %vm320 = vcmask 97280
      %v322 = vsel %vm320, %v319, %v313
      %v323 = vld [vmem:[%s1] sm:$0xf]
      %v324 = vld [vmem:[%s1 + $0x4] sm:$0xf]
      %v325 = vld [vmem:[%s2] sm:$0x1]
      %v327 = vperm.slane %v325, 0
      %v331 = vunpack.c.l.b16 %v323
      %v332 = vunpack.c.l.b16 %v324
      %v333 = vpack.c.b16 %v332, %v331
      %vm335 = vcmask 130048
      %v336 = vsel %vm335, %v322, 0
      %338 = vmatpush.bf16.msra.mxu0 0
      %339 = vmatpush.bf16.msra.mxu0 0
      %340 = vmatpush.bf16.msra.mxu0 0
      %341 = vmatpush.bf16.msra.mxu0 0
      %342 = vmatpush.bf16.msra.mxu0 0
      %343 = vmatpush.bf16.msra.mxu0 0
      %344 = vmatpush.bf16.msra.mxu0 0
      %345 = vmatpush.bf16.msra.mxu0 %v333
      %346 = vmatmul.bf16.gmra.mxu0 %v336
      %v347 = vpop.f32.mrf.mxu0
      %v348 = vadd.f32 %v327, %v347
      %v349 = vpop.f32.mrf.mxu0
      %v350 = vadd.f32 %v327, %v349
      %351 = vdwg.mxu0
      %v352 = vpack.c.bf16 %v348, %v348
      %v353 = vpack.c.bf16 %v350, %v350
      %v356 = vunpack.c.l.b16 %v352
      %v357 = vunpack.c.l.b16 %v353
      %v358 = vpack.c.b16 %v357, %v356
      %v359 = vrot.slane %v358, 7
      %360 = vrot.lane.b32.xlu0 %v359, 120
      %v361 = vpop.permute.xlu0 %360
      %v364 = vsel %vm232, 0, %v361
      %v365 = vsel %vm232, %v361, 0
      %v366 = vshrl.u32 %v364, 16
      %v368 = vshll.u32 %v364, 16
      %v370 = vrot.slane %v368, 1
      %v371 = vor.u32 %v366, %v370
      %v372 = vshll.u32 %v365, 16
      %v374 = vrot.slane %v372, 1
      %v375 = vsel %vm284, %v371, %v374
      %376 = vrot.lane.b32.xlu0 %v375, 8
      %v377 = vpop.permute.xlu0 %376
      %v380 = vrot.slane %v364, 1
      %v381 = vrot.slane %v365, 1
      %v382 = vsel %vm301, %v380, %v381
      %383 = vrot.lane.b32.xlu0 %v382, 16
      %v384 = vpop.permute.xlu0 %383
      %vm385 = vsmask.f32 6400
      %v386 = vrot.slane %v366, 1
      %v387 = vrot.slane %v368, 2
      %v388 = vor.u32 %v386, %v387
      %v389 = vshrl.u32 %v365, 16
      %v391 = vrot.slane %v389, 1
      %v392 = vrot.slane %v372, 2
      %v393 = vor.u32 %v391, %v392
      %v394 = vsel %vm385, %v388, %v393
      %395 = vrot.lane.b32.xlu0 %v394, 24
      %v396 = vpop.permute.xlu0 %395
      %vm397 = vcmask 1045504
      %v398 = vrot.slane %v364, 2
      %v399 = vrot.slane %v365, 2
      %v400 = vsel %vm397, %v398, %v399
      %401 = vrot.lane.b32.xlu0 %v400, 32
      %v402 = vpop.permute.xlu0 %401
      %v404 = vsel %vm317, %v364, %v377
      %v406 = vsel %vm335, %v404, %v384
      %vm407 = vcmask 195584
      %v409 = vsel %vm407, %v406, %v396
      %vm410 = vcmask 261120
      %v412 = vsel %vm410, %v409, %v402
      %v413 = vld [vmem:[%s3] sm:$0xf]
      %v414 = vld [vmem:[%s3 + $0x4] sm:$0xf]
      %v415 = vld [vmem:[%s3 + $0x8] sm:$0xf]
      %v416 = vld [vmem:[%s3 + $0xc] sm:$0xf]
      %v417 = vld [vmem:[%s3 + $0x10] sm:$0xf]
      %v418 = vld [vmem:[%s4] sm:$0x1]
      %v420 = vperm.slane %v418, 0
      %v427 = vunpack.c.l.b16 %v413
      %v428 = vunpack.c.l.b16 %v414
      %v429 = vunpack.c.l.b16 %v415
      %v430 = vunpack.c.l.b16 %v416
      %v431 = vunpack.c.l.b16 %v417
      %v432 = vpack.c.b16 %v428, %v427
      %v433 = vpack.c.b16 %v430, %v429
      %v434 = vpack.c.b16 %v431, %v431
      %vm437 = vcmask 326656
      %v438 = vsel %vm437, %v412, 0
      %vm440 = vcmask 1043456
      %v442 = vsel %vm440, %v434, 0
      %444 = vmatpush.bf16.msra.mxu0 0
      %445 = vmatpush.bf16.msra.mxu0 0
      %446 = vmatpush.bf16.msra.mxu0 0
      %447 = vmatpush.bf16.msra.mxu0 0
      %448 = vmatpush.bf16.msra.mxu0 0
      %449 = vmatpush.bf16.msra.mxu0 %v442
      %450 = vmatpush.bf16.msra.mxu0 %v433
      %451 = vmatpush.bf16.msra.mxu0 %v432
      %452 = vmatmul.bf16.gmra.mxu0 %v438
      %v453 = vpop.f32.mrf.mxu0
      %v454 = vadd.f32 %v420, %v453
      %v455 = vpop.f32.mrf.mxu0
      %v456 = vadd.f32 %v420, %v455
      %457 = vdwg.mxu0
      %v458 = vmax.f32 %v348, 0.0
      %v459 = vmax.f32 %v350, 0.0
      %460 = vst.msk [vmem:[%s224] sm:$0xff] %vm317, %v458
      %461 = vst.msk [vmem:[%s224 + $0x8] sm:$0xff] %vm317, %v459
      %v462 = vmax.f32 %v454, 0.0
      %v463 = vmax.f32 %v456, 0.0
      %466 = vrot.lane.b32.xlu0 %v462, 8
      %v467 = vpop.permute.xlu0 %466
      %468 = vrot.lane.b32.xlu0 %v463, 8
      %v469 = vpop.permute.xlu0 %468
      %vm472 = vcmask 130112
      %473 = vst.msk [vmem:[%s224] sm:$0xff] %vm472, %v467
      %474 = vst.msk [vmem:[%s224 + $0x8] sm:$0xff] %vm472, %v469
      %p475 = scmp.lt.s32.totalorder %s16, 1
      %s476 = scalar_select %p475, %s16, 1
      %s477 = smul.addr %s476, 2
      %s478 = smul.addr %s477, 8
      %s479 = scalar_lea.vmem %s5, %s478
      // Predicated region
      $region41: #{inception_layer.1} parent=39 // pred_check
        %p480 = pneg %p144
      $region42: #{inception_layer.1} parent=39 // pred_check_branch
        %482 = sbr.rel (%p480) target = $region44
      $region43: #{inception_layer.1} parent=39 // pred_region
        _
      $region44: #{inception_layer.1} parent=39 // pred_fallthru
        _
    $region40: #{inception_layer.1} parent=5 // pred_fallthru
      _
    %p483 = scmp.le.s32.totalorder 2, %s11
    // Predicated region
    $region45: #{inception_layer.1} parent=5 // pred_check
      %p484 = pneg %p483
    $region46: #{inception_layer.1} parent=5 // pred_check_branch
      %486 = sbr.rel (%p484) target = $region48
    $region47: #{inception_layer.1} parent=5 // pred_region
      %s487 = ssub.s32 %s11, 2
      // Predicated region
      $region49: #{inception_layer.1} parent=47 // pred_check
        %p488 = pneg %p150
      $region50: #{inception_layer.1} parent=47 // pred_check_branch
        %490 = sbr.rel (%p488) target = $region52
      $region51: #{inception_layer.1} parent=47 // pred_region
        %p491 = scmp.lt.s32.totalorder %s17, 1
        %s492 = scalar_select %p491, %s17, 1
        %s493 = smul.addr %s492, 2
        %s494 = smul.addr %s493, 8
        %s495 = scalar_lea.vmem %s5, %s494
      $region52: #{inception_layer.1} parent=47 // pred_fallthru
        _
    $region48: #{inception_layer.1} parent=5 // pred_fallthru
      _
  $region6: #{inception_layer.1} parent=0 // loop_footer
    %s15 = sadd.s32 1, %s11
  $region7: #{inception_layer.1} parent=0 // loop_footer_branch
    %10 = sbr.rel target = $region3
  $region8: #{inception_layer.1} parent=0 // loop_exit
    _

</llo_original>
